<compile_context>
chip_gen: v7x
topology: tpu7x:2x2x1
jax: 0.10.0
libtpu: 0.0.40
codegen_flags: <defaults>
</compile_context>

<pallas_src>
import functools

import jax
import jax.numpy as jnp
from jax.experimental import pallas as pl
from jax.experimental.pallas import tpu as pltpu


def _round_up(x: int, m: int) -> int:
    return (x + m - 1) // m * m


def mlp_kernel(x_ref, w1_ref, b1_ref, w2_ref, b2_ref, o_ref):
    # Hidden layer: bf16 matmul on the MXU, f32 accumulation.
    h = jnp.dot(x_ref[...], w1_ref[...], preferred_element_type=jnp.float32)
    # Bias add + ReLU kept in f32 on the VPU (no bf16 elementwise on v5e).
    h = jnp.maximum(h + b1_ref[...], 0.0)
    # Output layer: cast only the dot input back to bf16, accumulate in f32.
    out = jnp.dot(h.astype(w2_ref.dtype), w2_ref[...],
                  preferred_element_type=jnp.float32)
    o_ref[...] = (out + b2_ref[...]).astype(o_ref.dtype)


def prepack_mlp_params(w1, b1, w2, b2):
    """One-time pre-pack of static parameters (hoisted out of the call path).

    w1: (D_in, H0), b1: (1, H0), w2: (H0, H1), b2: (1, H1).
    Weights -> bf16 padded to 128-multiples (half DMA bytes, 2x MXU rate);
    biases stay f32 (bias add / ReLU run on the f32 VPU path, v5e-safe).
    Zero padding is semantics-preserving: padded K rows/cols contribute 0,
    padded hidden units are relu(0 + 0) = 0, padded output cols are sliced off.
    """
    d_in, h0 = w1.shape
    h1 = w2.shape[1]
    d_pad = _round_up(d_in, 128)
    h0_pad = _round_up(h0, 128)
    h1_pad = _round_up(h1, 128)   # lane-dense output (unmasked vst)

    w1p = jnp.zeros((d_pad, h0_pad), jnp.bfloat16).at[:d_in, :h0].set(
        w1.astype(jnp.bfloat16))
    b1p = jnp.zeros((1, h0_pad), jnp.float32).at[:, :h0].set(
        b1.astype(jnp.float32))
    w2p = jnp.zeros((h0_pad, h1_pad), jnp.bfloat16).at[:h0, :h1].set(
        w2.astype(jnp.bfloat16))
    b2p = jnp.zeros((1, h1_pad), jnp.float32).at[:, :h1].set(
        b2.astype(jnp.float32))
    return w1p, b1p, w2p, b2p


def _choose_batch_tiling(b: int) -> tuple[int, int]:
    """Return (B_pad, block_b). Minimal padding for tiny batches; 256-row
    tiles for big batches; >=2 grid blocks when there is enough work so the
    'parallel' grid axis can shard across v7x's two TensorCores."""
    b_pad = _round_up(max(b, 1), 16)      # bf16 sublane pack, not 128
    if b_pad >= 512:
        block_b = 256                     # fills a 256x256 MXU pass (v6e/v7x)
    elif b_pad >= 64:
        block_b = b_pad // 2              # 2 grid steps -> both v7x TCs engage
    else:
        block_b = b_pad                   # single tile; splitting is pure overhead
    b_pad = _round_up(b_pad, block_b)
    return b_pad, block_b


@functools.partial(jax.jit, static_argnames=("h1_out",))
def mlp_forward_packed(x, w1p, b1p, w2p, b2p, *, h1_out):
    """x: (B, D_in) f32; pre-packed params from prepack_mlp_params.

    Returns (B, h1_out) float32.
    """
    b, d_in = x.shape
    d_pad, h0_pad = w1p.shape
    h1_pad = w2p.shape[1]

    b_pad, block_b = _choose_batch_tiling(b)

    # Only the activations are padded per call (params were pre-packed once).
    xp = jnp.zeros((b_pad, d_pad), jnp.bfloat16).at[:b, :d_in].set(
        x.astype(jnp.bfloat16))

    grid = (b_pad // block_b,)

    # Advisory cost on the padded shapes actually executed by the MXU.
    flops = 2 * b_pad * (d_pad * h0_pad + h0_pad * h1_pad)
    bytes_accessed = (b_pad * d_pad * 2 + d_pad * h0_pad * 2
                      + h0_pad * h1_pad * 2 + h0_pad * 4 + h1_pad * 4
                      + b_pad * h1_pad * 4)

    out_padded = pl.pallas_call(
        mlp_kernel,
        out_shape=jax.ShapeDtypeStruct((b_pad, h1_pad), jnp.float32),
        grid=grid,
        in_specs=[
            # Activations: tiled over the batch grid axis.
            pl.BlockSpec((block_b, d_pad), lambda i: (i, 0)),
            # Weights / biases: constant index -> resident across batch tiles.
            pl.BlockSpec((d_pad, h0_pad), lambda i: (0, 0)),
            pl.BlockSpec((1, h0_pad), lambda i: (0, 0)),
            pl.BlockSpec((h0_pad, h1_pad), lambda i: (0, 0)),
            pl.BlockSpec((1, h1_pad), lambda i: (0, 0)),
        ],
        out_specs=pl.BlockSpec((block_b, h1_pad), lambda i: (i, 0)),
        compiler_params=pltpu.CompilerParams(
            # Batch tiles are independent; with >=2 grid blocks this shards
            # across v7x's 2 TCs, and is a harmless no-op on v5e/v6e or when
            # the grid has a single step (tiny batches).
            dimension_semantics=("parallel",),
            # Safe on all chips (<= v7x's 64 MiB physical); tiny footprint here.
            vmem_limit_bytes=32 * 1024 * 1024,
        ),
        cost_estimate=pl.CostEstimate(
            flops=flops, transcendentals=0, bytes_accessed=bytes_accessed),
    )(xp, w1p, b1p, w2p, b2p)

    return out_padded[:b, :h1_out]


def mlp_forward(x, w1, b1, w2, b2):
    """Convenience wrapper matching the old signature (packs params inline).
    Prefer prepack_mlp_params + mlp_forward_packed to keep packing one-time."""
    packed = prepack_mlp_params(w1, b1, w2, b2)
    return mlp_forward_packed(x, *packed, h1_out=w2.shape[1])


def _ref_bf16_path(x, w1, b1, w2, b2):
    """Pure-JAX reference following the kernel's precision path (bf16 dots, f32 acc)."""
    h = jnp.dot(x.astype(jnp.bfloat16), w1.astype(jnp.bfloat16),
                preferred_element_type=jnp.float32)
    h = jnp.maximum(h + b1, 0.0)
    out = jnp.dot(h.astype(jnp.bfloat16), w2.astype(jnp.bfloat16),
                  preferred_element_type=jnp.float32) + b2
    return out


if __name__ == "__main__":
    # Config analog: image 16x16, hidden_size = [32, 8], batch of 2 images.
    batch = 2
    image_height, image_width = 16, 16
    hidden_size = [32, 8]
    d_in = image_height * image_width

    key = jax.random.PRNGKey(0)
    k_x, k_w1, k_b1, k_w2, k_b2 = jax.random.split(key, 5)

    # "src" = list of (H, W) images -> flattened to (batch, H*W), matching
    # torch.tensor(src).view(batch, H*W).float()
    src = jax.random.normal(k_x, (batch, image_height, image_width), dtype=jnp.float32)
    x = src.reshape(batch, d_in)

    # Parameters (shapes match nn.Linear(d_in, h0), nn.Linear(h0, h1)),
    # stored pre-transposed as (in, out).
    w1 = jax.random.normal(k_w1, (d_in, hidden_size[0]), dtype=jnp.float32) * (
        1.0 / jnp.sqrt(d_in))
    b1 = jax.random.normal(k_b1, (1, hidden_size[0]), dtype=jnp.float32) * 0.01
    w2 = jax.random.normal(k_w2, (hidden_size[0], hidden_size[1]), dtype=jnp.float32) * (
        1.0 / jnp.sqrt(hidden_size[0]))
    b2 = jax.random.normal(k_b2, (1, hidden_size[1]), dtype=jnp.float32) * 0.01

    # One-time parameter pre-pack (hoisted out of the per-call path).
    w1p, b1p, w2p, b2p = prepack_mlp_params(w1, b1, w2, b2)
    w1p, b1p, w2p, b2p = jax.block_until_ready((w1p, b1p, w2p, b2p))

    out = mlp_forward_packed(x, w1p, b1p, w2p, b2p, h1_out=hidden_size[1])
    out = jax.block_until_ready(out)
    assert out.shape == (batch, hidden_size[1])

    # Check against a reference that follows the same bf16/f32 precision path.
    ref = _ref_bf16_path(x, w1, b1, w2, b2)
    assert jnp.allclose(out, ref, atol=1e-3, rtol=1e-3), "mismatch vs bf16-path reference"

    # Sanity check against the full-f32 math (bf16 error budget).
    ref_f32 = jnp.maximum(x @ w1 + b1, 0.0) @ w2 + b2
    assert jnp.allclose(out, ref_f32, atol=5e-2, rtol=5e-2), "mismatch vs f32 reference"

    print("KERNEL_OK")
</pallas_src>

<mosaic_0001>
module attributes {stable_mosaic.version = 11 : i64} {
  func.func @mlp_kernel(%arg0: i32, %arg1: memref<16x256xbf16, #tpu.memory_space<vmem>>, %arg2: memref<256x128xbf16, #tpu.memory_space<vmem>>, %arg3: memref<1x128xf32, #tpu.memory_space<vmem>>, %arg4: memref<128x128xbf16, #tpu.memory_space<vmem>>, %arg5: memref<1x128xf32, #tpu.memory_space<vmem>>, %arg6: memref<16x128xf32, #tpu.memory_space<vmem>>) attributes {dimension_semantics = [#tpu.dimension_semantics<parallel>], iteration_bounds = array<i64: 1>, scalar_prefetch = 0 : i64, scratch_operands = 0 : i64, tpu.core_type = #tpu.core_type<tc>, window_params = [{transform_indices = @transform_0, window_bounds = array<i64: 16, 256>}, {pipeline_mode = #tpu.pipeline_mode<synchronous>, transform_indices = @transform_1, window_bounds = array<i64: 256, 128>}, {pipeline_mode = #tpu.pipeline_mode<synchronous>, transform_indices = @transform_2, window_bounds = array<i64: 1, 128>}, {pipeline_mode = #tpu.pipeline_mode<synchronous>, transform_indices = @transform_3, window_bounds = array<i64: 128, 128>}, {pipeline_mode = #tpu.pipeline_mode<synchronous>, transform_indices = @transform_4, window_bounds = array<i64: 1, 128>}, {transform_indices = @transform_5, window_bounds = array<i64: 16, 128>}]} {
    %c0 = arith.constant 0 : index
    %c0_0 = arith.constant 0 : index
    %0 = vector.load %arg1[%c0, %c0_0] : memref<16x256xbf16, #tpu.memory_space<vmem>>, vector<16x256xbf16>
    %c0_1 = arith.constant 0 : index
    %c0_2 = arith.constant 0 : index
    %1 = vector.load %arg2[%c0_1, %c0_2] : memref<256x128xbf16, #tpu.memory_space<vmem>>, vector<256x128xbf16>
    %cst = arith.constant dense<0.000000e+00> : vector<16x128xf32>
    %2 = tpu.matmul %0, %1, %cst {dimension_numbers = #tpu.dot_dimension_numbers<[1], [0], [0], [1], [0, 0, 1, 1], [], []>} : vector<16x256xbf16>, vector<256x128xbf16>, vector<16x128xf32> -> vector<16x128xf32>
    %c0_3 = arith.constant 0 : index
    %c0_4 = arith.constant 0 : index
    %3 = vector.load %arg3[%c0_3, %c0_4] : memref<1x128xf32, #tpu.memory_space<vmem>>, vector<1x128xf32>
    %4 = vector.broadcast %3 : vector<1x128xf32> to vector<16x128xf32>
    %5 = arith.addf %2, %4 : vector<16x128xf32>
    %cst_5 = arith.constant 0.000000e+00 : f32
    %6 = vector.broadcast %cst_5 : f32 to vector<16x128xf32>
    %7 = arith.maximumf %5, %6 : vector<16x128xf32>
    %8 = arith.truncf %7 : vector<16x128xf32> to vector<16x128xbf16>
    %c0_6 = arith.constant 0 : index
    %c0_7 = arith.constant 0 : index
    %9 = vector.load %arg4[%c0_6, %c0_7] : memref<128x128xbf16, #tpu.memory_space<vmem>>, vector<128x128xbf16>
    %cst_8 = arith.constant dense<0.000000e+00> : vector<16x128xf32>
    %10 = tpu.matmul %8, %9, %cst_8 {dimension_numbers = #tpu.dot_dimension_numbers<[1], [0], [0], [1], [0, 0, 1, 1], [], []>} : vector<16x128xbf16>, vector<128x128xbf16>, vector<16x128xf32> -> vector<16x128xf32>
    %c0_9 = arith.constant 0 : index
    %c0_10 = arith.constant 0 : index
    %11 = vector.load %arg5[%c0_9, %c0_10] : memref<1x128xf32, #tpu.memory_space<vmem>>, vector<1x128xf32>
    %12 = vector.broadcast %11 : vector<1x128xf32> to vector<16x128xf32>
    %13 = arith.addf %10, %12 : vector<16x128xf32>
    %c0_11 = arith.constant 0 : index
    %c0_12 = arith.constant 0 : index
    %14 = vector.load %arg6[%c0_11, %c0_12] : memref<16x128xf32, #tpu.memory_space<vmem>>, vector<16x128xf32>
    tpu.vector_store %arg6[%c0_11, %c0_12], %13 {strides = array<i32>} : memref<16x128xf32, #tpu.memory_space<vmem>>, vector<16x128xf32>,
    return
  }
  func.func @transform_0(%arg0: i32) -> (i32, i32) {
    %c0_i32 = arith.constant 0 : i32
    %c0_i32_0 = arith.constant 0 : i32
    return %arg0, %c0_i32 : i32, i32
  }
  func.func @transform_1(%arg0: i32) -> (i32, i32) {
    %c0_i32 = arith.constant 0 : i32
    %c0_i32_0 = arith.constant 0 : i32
    %c0_i32_1 = arith.constant 0 : i32
    return %c0_i32, %c0_i32_0 : i32, i32
  }
  func.func @transform_2(%arg0: i32) -> (i32, i32) {
    %c0_i32 = arith.constant 0 : i32
    %c0_i32_0 = arith.constant 0 : i32
    %c0_i32_1 = arith.constant 0 : i32
    return %c0_i32, %c0_i32_0 : i32, i32
  }
  func.func @transform_3(%arg0: i32) -> (i32, i32) {
    %c0_i32 = arith.constant 0 : i32
    %c0_i32_0 = arith.constant 0 : i32
    %c0_i32_1 = arith.constant 0 : i32
    return %c0_i32, %c0_i32_0 : i32, i32
  }
  func.func @transform_4(%arg0: i32) -> (i32, i32) {
    %c0_i32 = arith.constant 0 : i32
    %c0_i32_0 = arith.constant 0 : i32
    %c0_i32_1 = arith.constant 0 : i32
    return %c0_i32, %c0_i32_0 : i32, i32
  }
  func.func @transform_5(%arg0: i32) -> (i32, i32) {
    %c0_i32 = arith.constant 0 : i32
    %c0_i32_0 = arith.constant 0 : i32
    return %arg0, %c0_i32 : i32, i32
  }
}

</mosaic_0001>

<llo_original>
// kernel: mlp_forward_packed.1
$region0: #{mlp_forward_packed.1}
  #allocation0 [shape = 'u32[]', space=smem, size = 0x4, offset = 0x4, fixed_abs, tag = 'smem constant byte address 0x4 - core index']
  #allocation1 [shape = 'u32[144,128]{1,0:T(1,128)}', space=vmem, size = 0x12000, scoped, tag = 'internal scratch']
  %s0 = inlined_call_operand.vmem [shape: bf16[16,256], index: 0, kind: input, shape index: {}]
  %s1 = inlined_call_operand.hbm [shape: bf16[256,128], index: 1, kind: input, shape index: {}]
  %s2 = inlined_call_operand.vmem [shape: f32[1,128], index: 2, kind: input, shape index: {}]
  %s3 = inlined_call_operand.hbm [shape: bf16[128,128], index: 3, kind: input, shape index: {}]
  %s4 = inlined_call_operand.vmem [shape: f32[1,128], index: 4, kind: input, shape index: {}]
  %s5 = inlined_call_operand.vmem [shape: f32[16,128], index: 5, kind: output, shape index: {}]
  %s6 = sld [smem:[#allocation0]]
  $region38: #{mlp_forward_packed.1} parent=0
    _
  %s8 = ssub.s32 1, %s6
  %s9 = scalar_select 0, %s8, %s6
  $region1: #{mlp_forward_packed.1} parent=0
    #allocation2 [shape = 'u8[65536]{0}', space=vmem, size = 0x10000, scoped, tag = 'input window, operand 1, single buffered']
    #allocation3 [shape = 's32[1]{0}', space=sflag, size = 0x4, scoped, tag = 'scoped memory for mlp_forward_packed.1']
    #allocation4 [shape = 'u8[32768]{0}', space=vmem, size = 0x8000, scoped, tag = 'input window, operand 3, single buffered']
    #allocation5 [shape = 's32[1]{0}', space=sflag, size = 0x4, scoped, tag = 'scoped memory for mlp_forward_packed.1']
    %10 = vsyncpa [#allocation3], 0
    %11 = vsyncpa [#allocation5], 0
    // Predicated region
    $region2: #{mlp_forward_packed.1} parent=1 // pred_check
      _
    $region3: #{mlp_forward_packed.1} parent=1 // pred_check_branch
      %13 = sbr.rel (0) target = $region5
    $region4: #{mlp_forward_packed.1} parent=1 // pred_region
      _
    $region5: #{mlp_forward_packed.1} parent=1 // pred_fallthru
      _
    // Predicated region
    $region6: #{mlp_forward_packed.1} parent=1 // pred_check
      _
    $region7: #{mlp_forward_packed.1} parent=1 // pred_check_branch
      %15 = sbr.rel (0) target = $region9
    $region8: #{mlp_forward_packed.1} parent=1 // pred_region
      %s17 = ssub.s32 2048, 2048
      %18 = vsyncadd [#allocation3], %s17
      %s19 = sshll.u32 [#allocation2], 4
      %s20 = int_to_ptr.vmem [resolvable:$true] %s19
      %25 = dma.hbm_to_vmem [thread:$0]  %s1, 2048, %s20, [#allocation3], 64, 64, 4
    $region9: #{mlp_forward_packed.1} parent=1 // pred_fallthru
      _
    // Predicated region
    $region10: #{mlp_forward_packed.1} parent=1 // pred_check
      _
    $region11: #{mlp_forward_packed.1} parent=1 // pred_check_branch
      %27 = sbr.rel (0) target = $region13
    $region12: #{mlp_forward_packed.1} parent=1 // pred_region
      _
    $region13: #{mlp_forward_packed.1} parent=1 // pred_fallthru
      _
    // Predicated region
    $region14: #{mlp_forward_packed.1} parent=1 // pred_check
      _
    $region15: #{mlp_forward_packed.1} parent=1 // pred_check_branch
      %29 = sbr.rel (0) target = $region17
    $region16: #{mlp_forward_packed.1} parent=1 // pred_region
      %s31 = ssub.s32 1024, 1024
      %32 = vsyncadd [#allocation5], %s31
      %s33 = sshll.u32 [#allocation4], 4
      %s34 = int_to_ptr.vmem [resolvable:$true] %s33
      %39 = dma.hbm_to_vmem [thread:$0]  %s3, 1024, %s34, [#allocation5], 64, 64, 4
    $region17: #{mlp_forward_packed.1} parent=1 // pred_fallthru
      _
    // Predicated region
    $region18: #{mlp_forward_packed.1} parent=1 // pred_check
      _
    $region19: #{mlp_forward_packed.1} parent=1 // pred_check_branch
      %41 = sbr.rel (0) target = $region21
    $region20: #{mlp_forward_packed.1} parent=1 // pred_region
      _
    $region21: #{mlp_forward_packed.1} parent=1 // pred_fallthru
      _
    // Predicated region
    $region22: #{mlp_forward_packed.1} parent=1 // pred_check
      _
    $region23: #{mlp_forward_packed.1} parent=1 // pred_check_branch
      %43 = sbr.rel (0) target = $region25
    $region24: #{mlp_forward_packed.1} parent=1 // pred_region
      %44 = dma.done [#allocation3], 2048
    $region25: #{mlp_forward_packed.1} parent=1 // pred_fallthru
      _
    // Predicated region
    $region26: #{mlp_forward_packed.1} parent=1 // pred_check
      _
    $region27: #{mlp_forward_packed.1} parent=1 // pred_check_branch
      %46 = sbr.rel (0) target = $region29
    $region28: #{mlp_forward_packed.1} parent=1 // pred_region
      %47 = dma.done [#allocation5], 1024
    $region29: #{mlp_forward_packed.1} parent=1 // pred_fallthru
      _
    %v49 = vld [vmem:[%s0] sm:$0xff]
    %v50 = vld [vmem:[%s0 + $0x8] sm:$0xff]
    %v51 = vld [vmem:[#allocation2] sm:$0xf]
    %v52 = vld [vmem:[#allocation2 + $0x4] sm:$0xf]
    %v53 = vld [vmem:[#allocation2 + $0x8] sm:$0xf]
    %v54 = vld [vmem:[#allocation2 + $0xc] sm:$0xf]
    %v55 = vld [vmem:[#allocation2 + $0x10] sm:$0xf]
    %v56 = vld [vmem:[#allocation2 + $0x14] sm:$0xf]
    %v57 = vld [vmem:[#allocation2 + $0x18] sm:$0xf]
    %v58 = vld [vmem:[#allocation2 + $0x1c] sm:$0xf]
    %v59 = vld [vmem:[#allocation2 + $0x20] sm:$0xf]
    %v60 = vld [vmem:[#allocation2 + $0x24] sm:$0xf]
    %v61 = vld [vmem:[#allocation2 + $0x28] sm:$0xf]
    %v62 = vld [vmem:[#allocation2 + $0x2c] sm:$0xf]
    %v63 = vld [vmem:[#allocation2 + $0x30] sm:$0xf]
    %v64 = vld [vmem:[#allocation2 + $0x34] sm:$0xf]
    %v65 = vld [vmem:[#allocation2 + $0x38] sm:$0xf]
    %v66 = vld [vmem:[#allocation2 + $0x3c] sm:$0xf]
    %v67 = vld [vmem:[#allocation2 + $0x40] sm:$0xf]
    %v68 = vld [vmem:[#allocation2 + $0x44] sm:$0xf]
    %v69 = vld [vmem:[#allocation2 + $0x48] sm:$0xf]
    %v70 = vld [vmem:[#allocation2 + $0x4c] sm:$0xf]
    %v71 = vld [vmem:[#allocation2 + $0x50] sm:$0xf]
    %v72 = vld [vmem:[#allocation2 + $0x54] sm:$0xf]
    %v73 = vld [vmem:[#allocation2 + $0x58] sm:$0xf]
    %v74 = vld [vmem:[#allocation2 + $0x5c] sm:$0xf]
    %v75 = vld [vmem:[#allocation2 + $0x60] sm:$0xf]
    %v76 = vld [vmem:[#allocation2 + $0x64] sm:$0xf]
    %v77 = vld [vmem:[#allocation2 + $0x68] sm:$0xf]
    %v78 = vld [vmem:[#allocation2 + $0x6c] sm:$0xf]
    %v79 = vld [vmem:[#allocation2 + $0x70] sm:$0xf]
    %v80 = vld [vmem:[#allocation2 + $0x74] sm:$0xf]
    %v81 = vld [vmem:[#allocation2 + $0x78] sm:$0xf]
    %v82 = vld [vmem:[#allocation2 + $0x7c] sm:$0xf]
    %v83 = vld [vmem:[%s2] sm:$0x1]
    %v85 = vlaneseq
    %v86 = vshrl.u32 %v85, 7
    %v87 = vsub.s32 0, %v86
    %v88 = vrot.slane %v83, %v87
    %v92 = vunpack.c.l.b16 %v49
    %v93 = vunpack.c.h.b16 %v49
    %v94 = vunpack.c.l.b16 %v50
    %v95 = vunpack.c.h.b16 %v50
    %v96 = vpack.c.b16 %v94, %v92
    %v97 = vpack.c.b16 %v95, %v93
    %v132 = vunpack.c.l.b16 %v51
    %v133 = vunpack.c.l.b16 %v52
    %v134 = vunpack.c.l.b16 %v53
    %v135 = vunpack.c.l.b16 %v54
    %v136 = vunpack.c.l.b16 %v55
    %v137 = vunpack.c.l.b16 %v56
    %v138 = vunpack.c.l.b16 %v57
    %v139 = vunpack.c.l.b16 %v58
    %v140 = vunpack.c.l.b16 %v59
    %v141 = vunpack.c.l.b16 %v60
    %v142 = vunpack.c.l.b16 %v61
    %v143 = vunpack.c.l.b16 %v62
    %v144 = vunpack.c.l.b16 %v63
    %v145 = vunpack.c.l.b16 %v64
    %v146 = vunpack.c.l.b16 %v65
    %v147 = vunpack.c.l.b16 %v66
    %v148 = vunpack.c.l.b16 %v67
    %v149 = vunpack.c.l.b16 %v68
    %v150 = vunpack.c.l.b16 %v69
    %v151 = vunpack.c.l.b16 %v70
    %v152 = vunpack.c.l.b16 %v71
    %v153 = vunpack.c.l.b16 %v72
    %v154 = vunpack.c.l.b16 %v73
    %v155 = vunpack.c.l.b16 %v74
    %v156 = vunpack.c.l.b16 %v75
    %v157 = vunpack.c.l.b16 %v76
    %v158 = vunpack.c.l.b16 %v77
    %v159 = vunpack.c.l.b16 %v78
    %v160 = vunpack.c.l.b16 %v79
    %v161 = vunpack.c.l.b16 %v80
    %v162 = vunpack.c.l.b16 %v81
    %v163 = vunpack.c.l.b16 %v82
    %v164 = vpack.c.b16 %v133, %v132
    %v165 = vpack.c.b16 %v135, %v134
    %v166 = vpack.c.b16 %v137, %v136
    %v167 = vpack.c.b16 %v139, %v138
    %v168 = vpack.c.b16 %v141, %v140
    %v169 = vpack.c.b16 %v143, %v142
    %v170 = vpack.c.b16 %v145, %v144
    %v171 = vpack.c.b16 %v147, %v146
    %v172 = vpack.c.b16 %v149, %v148
    %v173 = vpack.c.b16 %v151, %v150
    %v174 = vpack.c.b16 %v153, %v152
    %v175 = vpack.c.b16 %v155, %v154
    %v176 = vpack.c.b16 %v157, %v156
    %v177 = vpack.c.b16 %v159, %v158
    %v178 = vpack.c.b16 %v161, %v160
    %v179 = vpack.c.b16 %v163, %v162
    %196 = vmatprep.subr.bf16.mxu0 0
    %197 = vmatpush1.bf16.msra.mxu0 %v164
    %198 = vmatprep.subr.bf16.mxu0 0
    %199 = vmatpush1.bf16.msra.mxu0 %v165
    %200 = vmatprep.subr.bf16.mxu0 0
    %201 = vmatpush1.bf16.msra.mxu0 %v166
    %202 = vmatprep.subr.bf16.mxu0 0
    %203 = vmatpush1.bf16.msra.mxu0 %v167
    %204 = vmatprep.subr.bf16.mxu0 0
    %205 = vmatpush1.bf16.msra.mxu0 %v168
    %206 = vmatprep.subr.bf16.mxu0 0
    %207 = vmatpush1.bf16.msra.mxu0 %v169
    %208 = vmatprep.subr.bf16.mxu0 0
    %209 = vmatpush1.bf16.msra.mxu0 %v170
    %210 = vmatprep.subr.bf16.mxu0 0
    %211 = vmatpush1.bf16.msra.mxu0 %v171
    %212 = vmatprep.subr.bf16.mxu0 0
    %213 = vmatpush1.bf16.msra.mxu0 %v172
    %214 = vmatprep.subr.bf16.mxu0 0
    %215 = vmatpush1.bf16.msra.mxu0 %v173
    %216 = vmatprep.subr.bf16.mxu0 0
    %217 = vmatpush1.bf16.msra.mxu0 %v174
    %218 = vmatprep.subr.bf16.mxu0 0
    %219 = vmatpush1.bf16.msra.mxu0 %v175
    %220 = vmatprep.subr.bf16.mxu0 0
    %221 = vmatpush1.bf16.msra.mxu0 %v176
    %222 = vmatprep.subr.bf16.mxu0 0
    %223 = vmatpush1.bf16.msra.mxu0 %v177
    %224 = vmatprep.subr.bf16.mxu0 0
    %225 = vmatpush1.bf16.msra.mxu0 %v178
    %226 = vmatprep.subr.bf16.mxu0 0
    %227 = vmatpush1.bf16.msra.mxu0 %v179
    %228 = vmatprep.mubr.bf16.mxu0 %v97
    %229 = vmatmul.mubr.bf16.gmra.mrb[0].mxu0 %v96
    %v230 = vpop.f32.mrb[0].mxu0
    %v231 = vadd.f32 %v88, %v230
    %v232 = vpop.f32.mrb[0].mxu0
    %v233 = vpop.f32.mrb[0].mxu0
    %v234 = vadd.f32 %v88, %v233
    %v235 = vpop.f32.mrb[0].mxu0
    %236 = vdwg.mxu0
    %v237 = vmax.f32 %v231, 0.0
    %v238 = vmax.f32 %v234, 0.0
    %v239 = vpack.c.bf16 %v238, %v237
    %v240 = vld [vmem:[#allocation4] sm:$0xf]
    %v241 = vld [vmem:[#allocation4 + $0x4] sm:$0xf]
    %v242 = vld [vmem:[#allocation4 + $0x8] sm:$0xf]
    %v243 = vld [vmem:[#allocation4 + $0xc] sm:$0xf]
    %v244 = vld [vmem:[#allocation4 + $0x10] sm:$0xf]
    %v245 = vld [vmem:[#allocation4 + $0x14] sm:$0xf]
    %v246 = vld [vmem:[#allocation4 + $0x18] sm:$0xf]
    %v247 = vld [vmem:[#allocation4 + $0x1c] sm:$0xf]
    %v248 = vld [vmem:[#allocation4 + $0x20] sm:$0xf]
    %v249 = vld [vmem:[#allocation4 + $0x24] sm:$0xf]
    %v250 = vld [vmem:[#allocation4 + $0x28] sm:$0xf]
    %v251 = vld [vmem:[#allocation4 + $0x2c] sm:$0xf]
    %v252 = vld [vmem:[#allocation4 + $0x30] sm:$0xf]
    %v253 = vld [vmem:[#allocation4 + $0x34] sm:$0xf]
    %v254 = vld [vmem:[#allocation4 + $0x38] sm:$0xf]
    %v255 = vld [vmem:[#allocation4 + $0x3c] sm:$0xf]
    %v256 = vld [vmem:[%s4] sm:$0x1]
    %v258 = vlaneseq
    %v259 = vshrl.u32 %v258, 7
    %v260 = vsub.s32 0, %v259
    %v261 = vrot.slane %v256, %v260
    %v279 = vunpack.c.l.b16 %v240
    %v280 = vunpack.c.l.b16 %v241
    %v281 = vunpack.c.l.b16 %v242
    %v282 = vunpack.c.l.b16 %v243
    %v283 = vunpack.c.l.b16 %v244
    %v284 = vunpack.c.l.b16 %v245
    %v285 = vunpack.c.l.b16 %v246
    %v286 = vunpack.c.l.b16 %v247
    %v287 = vunpack.c.l.b16 %v248
    %v288 = vunpack.c.l.b16 %v249
    %v289 = vunpack.c.l.b16 %v250
    %v290 = vunpack.c.l.b16 %v251
    %v291 = vunpack.c.l.b16 %v252
    %v292 = vunpack.c.l.b16 %v253
    %v293 = vunpack.c.l.b16 %v254
    %v294 = vunpack.c.l.b16 %v255
    %v295 = vpack.c.b16 %v280, %v279
    %v296 = vpack.c.b16 %v282, %v281
    %v297 = vpack.c.b16 %v284, %v283
    %v298 = vpack.c.b16 %v286, %v285
    %v299 = vpack.c.b16 %v288, %v287
    %v300 = vpack.c.b16 %v290, %v289
    %v301 = vpack.c.b16 %v292, %v291
    %v302 = vpack.c.b16 %v294, %v293
    %311 = vmatprep.subr.bf16.mxu0 0
    %312 = vmatpush1.bf16.msra.mxu0 %v295
    %313 = vmatprep.subr.bf16.mxu0 0
    %314 = vmatpush1.bf16.msra.mxu0 %v296
    %315 = vmatprep.subr.bf16.mxu0 0
    %316 = vmatpush1.bf16.msra.mxu0 %v297
    %317 = vmatprep.subr.bf16.mxu0 0
    %318 = vmatpush1.bf16.msra.mxu0 %v298
    %319 = vmatprep.subr.bf16.mxu0 0
    %320 = vmatpush1.bf16.msra.mxu0 %v299
    %321 = vmatprep.subr.bf16.mxu0 0
    %322 = vmatpush1.bf16.msra.mxu0 %v300
    %323 = vmatprep.subr.bf16.mxu0 0
    %324 = vmatpush1.bf16.msra.mxu0 %v301
    %325 = vmatprep.subr.bf16.mxu0 0
    %326 = vmatpush1.bf16.msra.mxu0 %v302
    %327 = vmatprep.subr.bf16.mxu0 0
    %328 = vmatpush1.bf16.msra.mxu0 0
    %329 = vmatprep.subr.bf16.mxu0 0
    %330 = vmatpush1.bf16.msra.mxu0 0
    %331 = vmatprep.subr.bf16.mxu0 0
    %332 = vmatpush1.bf16.msra.mxu0 0
    %333 = vmatprep.subr.bf16.mxu0 0
    %334 = vmatpush1.bf16.msra.mxu0 0
    %335 = vmatprep.subr.bf16.mxu0 0
    %336 = vmatpush1.bf16.msra.mxu0 0
    %337 = vmatprep.subr.bf16.mxu0 0
    %338 = vmatpush1.bf16.msra.mxu0 0
    %339 = vmatprep.subr.bf16.mxu0 0
    %340 = vmatpush1.bf16.msra.mxu0 0
    %341 = vmatprep.subr.bf16.mxu0 0
    %342 = vmatpush1.bf16.msra.mxu0 0
    %343 = vmatprep.mubr.bf16.mxu0 0
    %344 = vmatmul.mubr.bf16.gmra.mrb[0].mxu0 %v239
    %v345 = vpop.f32.mrb[0].mxu0
    %v346 = vadd.f32 %v261, %v345
    %v347 = vpop.f32.mrb[0].mxu0
    %v348 = vpop.f32.mrb[0].mxu0
    %v349 = vadd.f32 %v261, %v348
    %v350 = vpop.f32.mrb[0].mxu0
    %351 = vdwg.mxu0
    %352 = vst [vmem:[%s5] sm:$0xff] %v346
    %353 = vst [vmem:[%s5 + $0x8] sm:$0xff] %v349
    // Predicated region
    $region30: #{mlp_forward_packed.1} parent=1 // pred_check
      _
    $region31: #{mlp_forward_packed.1} parent=1 // pred_check_branch
      %355 = sbr.rel (0) target = $region33
    $region32: #{mlp_forward_packed.1} parent=1 // pred_region
      _
    $region33: #{mlp_forward_packed.1} parent=1 // pred_fallthru
      _
    // Predicated region
    $region34: #{mlp_forward_packed.1} parent=1 // pred_check
      _
    $region35: #{mlp_forward_packed.1} parent=1 // pred_check_branch
      %357 = sbr.rel (0) target = $region37
    $region36: #{mlp_forward_packed.1} parent=1 // pred_region
      _
    $region37: #{mlp_forward_packed.1} parent=1 // pred_fallthru
      _
    %358 = vsyncpa [#allocation3], 1
    %359 = vsyncpa [#allocation5], 1

</llo_original>
